<compile_context>
chip_gen: v6e
topology: v6e:2x2x1
jax: 0.10.0
libtpu: 0.0.40
codegen_flags: <defaults>
</compile_context>

<pallas_src>
import jax
import jax.numpy as jnp
from jax.experimental import pallas as pl
from jax.experimental.pallas import tpu as pltpu


def _round_up(a, m):
    return ((a + m - 1) // m) * m


def cam_kernel(x_ref, w1_ref, b1_ref, a1_ref, w2_ref, b2_ref, a2_ref,
               w3_ref, b3_ref, scale_ref, o_ref):
    x = x_ref[...]

    # fc1 + PReLU (single learned slope, read once from SMEM)
    h = jnp.dot(x, w1_ref[...], preferred_element_type=jnp.float32) + b1_ref[...]
    a1 = a1_ref[0]
    h = jnp.where(h >= 0.0, h, a1 * h)

    # fc2 + PReLU
    h = jnp.dot(h, w2_ref[...], preferred_element_type=jnp.float32) + b2_ref[...]
    a2 = a2_ref[0]
    h = jnp.where(h >= 0.0, h, a2 * h)

    # fc3 + Sigmoid (EUP) with the 0.2/1.0/0.1 per-third scaling fused into one
    # lane-dense store of the whole [TB, 3*stage_num] slab.  f32 math, cast to
    # the (possibly bf16) output dtype only at the store.
    h = jnp.dot(h, w3_ref[...], preferred_element_type=jnp.float32) + b3_ref[...]
    o_ref[...] = (jax.nn.sigmoid(h) * scale_ref[...]).astype(o_ref.dtype)


def _cam_pallas_slab(x, w1, b1, a1, w2, b2, a2, w3, b3, *, block_b, out_dtype):
    """Pallas path; returns the scaled [B, 3*stage_num] slab and stage_num."""
    B, in_c = x.shape
    H1 = w1.shape[1]
    H2 = w2.shape[1]
    out_dim = w3.shape[1]
    stage_num = out_dim // 3

    # Per-column output scale (0.2 first third, 1.0 middle, 0.1 last).
    scale = jnp.concatenate([
        jnp.full((stage_num,), 0.2, jnp.float32),
        jnp.ones((stage_num,), jnp.float32),
        jnp.full((stage_num,), 0.1, jnp.float32),
    ])[None, :]

    # Batch tile: as big as block_b allows, but capped so the grid keeps >=2
    # steps whenever B is large enough -- v7x has 2 TensorCores and
    # dimension_semantics=("parallel",) shards batch tiles across them.
    # Rows are kept a multiple of 8 sublanes.
    Bp8 = _round_up(B, 8)
    TB = max(8, min(block_b, _round_up(pl.cdiv(Bp8, 2), 8)))
    Bp = _round_up(B, TB)
    if Bp != B:
        x = jnp.pad(x, ((0, Bp - B), (0, 0)))
    grid = (Bp // TB,)

    def resident(shape):
        # Constant index_map: block never changes -> weights/biases stay
        # VMEM-resident, not re-DMAed per grid step.
        return pl.BlockSpec(shape, lambda i: (0, 0))

    smem = pl.BlockSpec(memory_space=pltpu.MemorySpace.SMEM)

    y = pl.pallas_call(
        cam_kernel,
        out_shape=jax.ShapeDtypeStruct((Bp, out_dim), out_dtype),
        grid=grid,
        in_specs=[
            pl.BlockSpec((TB, in_c), lambda i: (i, 0)),       # x batch tile
            resident((in_c, H1)), resident((1, H1)), smem,    # w1, b1, alpha1
            resident((H1, H2)), resident((1, H2)), smem,      # w2, b2, alpha2
            resident((H2, out_dim)), resident((1, out_dim)),  # w3, b3
            resident((1, out_dim)),                           # scale row
        ],
        out_specs=pl.BlockSpec((TB, out_dim), lambda i: (i, 0)),
        compiler_params=pltpu.CompilerParams(
            dimension_semantics=("parallel",),
            vmem_limit_bytes=48 * 1024 * 1024),
    )(x, w1, b1, a1, w2, b2, a2, w3, b3, scale)

    # Padded rows [B:Bp] hold sigmoid(b3)-style garbage; slice them off here.
    return y[:B], stage_num


def _cam_xla(x, w1, b1, a1, w2, b2, a2, w3, b3):
    """Plain XLA path for tiny batches (pallas launch overhead dominates)."""
    h = x @ w1 + b1
    h = jnp.where(h >= 0, h, a1[0] * h)
    h = h @ w2 + b2
    h = jnp.where(h >= 0, h, a2[0] * h)
    y = jax.nn.sigmoid(h @ w3 + b3)
    n = y.shape[1] // 3
    return y[:, :n] * 0.2, y[:, n:2 * n], y[:, 2 * n:] * 0.1


def cam_forward_slab(x, w1, b1, a1, w2, b2, a2, w3, b3, *, block_b=16384,
                     out_dtype=jnp.float32):
    """Scaled output as one lane-dense [B, 3, stage_num] slab (no narrow slices)."""
    y, n = _cam_pallas_slab(x, w1, b1, a1, w2, b2, a2, w3, b3,
                            block_b=block_b, out_dtype=out_dtype)
    return y.reshape(y.shape[0], 3, n)


def cam_forward(x, w1, b1, a1, w2, b2, a2, w3, b3, *, block_b=16384,
                out_dtype=jnp.float32, min_pallas_batch=4096, use_pallas=None):
    """CAM MLP; returns the (0.2*y1, y2, 0.1*y3) thirds like the PyTorch module."""
    B = x.shape[0]
    if use_pallas is None:
        use_pallas = B >= min_pallas_batch
    if not use_pallas:
        y1, y2, y3 = _cam_xla(x, w1, b1, a1, w2, b2, a2, w3, b3)
        return (y1.astype(out_dtype), y2.astype(out_dtype), y3.astype(out_dtype))

    y, n = _cam_pallas_slab(x, w1, b1, a1, w2, b2, a2, w3, b3,
                            block_b=block_b, out_dtype=out_dtype)
    return y[:, :n], y[:, n:2 * n], y[:, 2 * n:]


def init_params(key, in_channels, stage_num, hidden_channels=64):
    k1, k2, k3, k4, k5, k6 = jax.random.split(key, 6)
    scale1 = 1.0 / jnp.sqrt(in_channels)
    scale2 = 1.0 / jnp.sqrt(hidden_channels)
    w1 = jax.random.uniform(k1, (in_channels, hidden_channels), jnp.float32,
                            -scale1, scale1)
    b1 = jax.random.uniform(k2, (1, hidden_channels), jnp.float32, -scale1, scale1)
    w2 = jax.random.uniform(k3, (hidden_channels, hidden_channels), jnp.float32,
                            -scale2, scale2)
    b2 = jax.random.uniform(k4, (1, hidden_channels), jnp.float32, -scale2, scale2)
    w3 = jax.random.uniform(k5, (hidden_channels, stage_num * 3), jnp.float32,
                            -scale2, scale2)
    b3 = jax.random.uniform(k6, (1, stage_num * 3), jnp.float32, -scale2, scale2)
    # PyTorch PReLU default: single parameter = 0.25
    a1 = jnp.array([0.25], dtype=jnp.float32)
    a2 = jnp.array([0.25], dtype=jnp.float32)
    return w1, b1, a1, w2, b2, a2, w3, b3


def cam_reference(x, w1, b1, a1, w2, b2, a2, w3, b3):
    return _cam_xla(x, w1, b1, a1, w2, b2, a2, w3, b3)


if __name__ == "__main__":
    key = jax.random.PRNGKey(0)
    k_x, k_x2, k_x3, k_p = jax.random.split(key, 4)

    B = 2
    in_channels = 4
    hidden_channels = 32
    stage_num = 8

    params = init_params(k_p, in_channels, stage_num, hidden_channels)

    # 1) Tiny batch: auto-dispatch (XLA path) AND forced Pallas path both match.
    x = jax.random.normal(k_x, (B, in_channels), dtype=jnp.float32)
    ref = cam_reference(x, *params)
    out_auto = jax.block_until_ready(cam_forward(x, *params))            # XLA path
    out_pl = jax.block_until_ready(cam_forward(x, *params, use_pallas=True))
    for o_a, o_p, r in zip(out_auto, out_pl, ref):
        assert o_a.shape == (B, stage_num) and o_p.shape == (B, stage_num)
        assert jnp.allclose(o_a, r, atol=1e-5, rtol=1e-5)
        assert jnp.allclose(o_p, r, atol=1e-5, rtol=1e-5)

    # 2) Non-multiple batch, forced small tile: exercises grid=3 + padding path.
    B2 = 300
    x2 = jax.random.normal(k_x2, (B2, in_channels), dtype=jnp.float32)
    out2 = jax.block_until_ready(
        cam_forward(x2, *params, block_b=128, use_pallas=True))
    ref2 = cam_reference(x2, *params)
    for o, r in zip(out2, ref2):
        assert o.shape == (B2, stage_num)
        assert jnp.allclose(o, r, atol=1e-5, rtol=1e-5)

    # 3) Large batch with default big tile (grid split in 2 for v7x megacore)
    #    and bf16 output (halves write-back traffic); compare at bf16 tolerance.
    B3 = 20000
    x3 = jax.random.normal(k_x3, (B3, in_channels), dtype=jnp.float32)
    out3 = jax.block_until_ready(
        cam_forward(x3, *params, out_dtype=jnp.bfloat16))
    slab3 = jax.block_until_ready(
        cam_forward_slab(x3, *params, out_dtype=jnp.bfloat16))
    ref3 = cam_reference(x3, *params)
    assert slab3.shape == (B3, 3, stage_num)
    for i, (o, r) in enumerate(zip(out3, ref3)):
        assert o.shape == (B3, stage_num) and o.dtype == jnp.bfloat16
        assert jnp.allclose(o.astype(jnp.float32), r, atol=1e-2, rtol=0)
        assert jnp.allclose(slab3[:, i].astype(jnp.float32), r, atol=1e-2, rtol=0)

    print("KERNEL_OK")
</pallas_src>

<mosaic_0001>
module attributes {stable_mosaic.version = 11 : i64} {
  func.func @cam_kernel(%arg0: i32, %arg1: memref<8x4xf32, #tpu.memory_space<vmem>>, %arg2: memref<4x32xf32, #tpu.memory_space<vmem>>, %arg3: memref<1x32xf32, #tpu.memory_space<vmem>>, %arg4: memref<1xf32, #tpu.memory_space<smem>>, %arg5: memref<32x32xf32, #tpu.memory_space<vmem>>, %arg6: memref<1x32xf32, #tpu.memory_space<vmem>>, %arg7: memref<1xf32, #tpu.memory_space<smem>>, %arg8: memref<32x24xf32, #tpu.memory_space<vmem>>, %arg9: memref<1x24xf32, #tpu.memory_space<vmem>>, %arg10: memref<1x24xf32, #tpu.memory_space<vmem>>, %arg11: memref<8x24xf32, #tpu.memory_space<vmem>>) attributes {dimension_semantics = [#tpu.dimension_semantics<parallel>], iteration_bounds = array<i64: 1>, scalar_prefetch = 0 : i64, scratch_operands = 0 : i64, tpu.core_type = #tpu.core_type<tc>, window_params = [{transform_indices = @transform_0, window_bounds = array<i64: 8, 4>}, {pipeline_mode = #tpu.pipeline_mode<synchronous>, transform_indices = @transform_1, window_bounds = array<i64: 4, 32>}, {pipeline_mode = #tpu.pipeline_mode<synchronous>, transform_indices = @transform_2, window_bounds = array<i64: 1, 32>}, {transform_indices = @transform_3, window_bounds = array<i64: 1>}, {pipeline_mode = #tpu.pipeline_mode<synchronous>, transform_indices = @transform_4, window_bounds = array<i64: 32, 32>}, {pipeline_mode = #tpu.pipeline_mode<synchronous>, transform_indices = @transform_5, window_bounds = array<i64: 1, 32>}, {transform_indices = @transform_6, window_bounds = array<i64: 1>}, {pipeline_mode = #tpu.pipeline_mode<synchronous>, transform_indices = @transform_7, window_bounds = array<i64: 32, 24>}, {pipeline_mode = #tpu.pipeline_mode<synchronous>, transform_indices = @transform_8, window_bounds = array<i64: 1, 24>}, {pipeline_mode = #tpu.pipeline_mode<synchronous>, transform_indices = @transform_9, window_bounds = array<i64: 1, 24>}, {transform_indices = @transform_10, window_bounds = array<i64: 8, 24>}]} {
    %c0 = arith.constant 0 : index
    %c0_0 = arith.constant 0 : index
    %0 = vector.load %arg1[%c0, %c0_0] : memref<8x4xf32, #tpu.memory_space<vmem>>, vector<8x4xf32>
    %c0_1 = arith.constant 0 : index
    %c0_2 = arith.constant 0 : index
    %1 = vector.load %arg2[%c0_1, %c0_2] : memref<4x32xf32, #tpu.memory_space<vmem>>, vector<4x32xf32>
    %cst = arith.constant dense<0.000000e+00> : vector<8x32xf32>
    %2 = tpu.matmul %0, %1, %cst {dimension_numbers = #tpu.dot_dimension_numbers<[1], [0], [0], [1], [0, 0, 1, 1], [], []>} : vector<8x4xf32>, vector<4x32xf32>, vector<8x32xf32> -> vector<8x32xf32>
    %c0_3 = arith.constant 0 : index
    %c0_4 = arith.constant 0 : index
    %3 = vector.load %arg3[%c0_3, %c0_4] : memref<1x32xf32, #tpu.memory_space<vmem>>, vector<1x32xf32>
    %4 = vector.broadcast %3 : vector<1x32xf32> to vector<8x32xf32>
    %5 = arith.addf %2, %4 : vector<8x32xf32>
    %c0_5 = arith.constant 0 : index
    %6 = memref.load %arg4[%c0_5] : memref<1xf32, #tpu.memory_space<smem>>
    %cst_6 = arith.constant 0.000000e+00 : f32
    %7 = vector.broadcast %cst_6 : f32 to vector<8x32xf32>
    %8 = arith.cmpf oge, %5, %7 : vector<8x32xf32>
    %9 = vector.broadcast %6 : f32 to vector<8x32xf32>
    %10 = arith.mulf %9, %5 : vector<8x32xf32>
    %11 = arith.select %8, %5, %10 : vector<8x32xi1>, vector<8x32xf32>
    %c0_7 = arith.constant 0 : index
    %c0_8 = arith.constant 0 : index
    %12 = vector.load %arg5[%c0_7, %c0_8] : memref<32x32xf32, #tpu.memory_space<vmem>>, vector<32x32xf32>
    %cst_9 = arith.constant dense<0.000000e+00> : vector<8x32xf32>
    %13 = tpu.matmul %11, %12, %cst_9 {dimension_numbers = #tpu.dot_dimension_numbers<[1], [0], [0], [1], [0, 0, 1, 1], [], []>} : vector<8x32xf32>, vector<32x32xf32>, vector<8x32xf32> -> vector<8x32xf32>
    %c0_10 = arith.constant 0 : index
    %c0_11 = arith.constant 0 : index
    %14 = vector.load %arg6[%c0_10, %c0_11] : memref<1x32xf32, #tpu.memory_space<vmem>>, vector<1x32xf32>
    %15 = vector.broadcast %14 : vector<1x32xf32> to vector<8x32xf32>
    %16 = arith.addf %13, %15 : vector<8x32xf32>
    %c0_12 = arith.constant 0 : index
    %17 = memref.load %arg7[%c0_12] : memref<1xf32, #tpu.memory_space<smem>>
    %cst_13 = arith.constant 0.000000e+00 : f32
    %18 = vector.broadcast %cst_13 : f32 to vector<8x32xf32>
    %19 = arith.cmpf oge, %16, %18 : vector<8x32xf32>
    %20 = vector.broadcast %17 : f32 to vector<8x32xf32>
    %21 = arith.mulf %20, %16 : vector<8x32xf32>
    %22 = arith.select %19, %16, %21 : vector<8x32xi1>, vector<8x32xf32>
    %c0_14 = arith.constant 0 : index
    %c0_15 = arith.constant 0 : index
    %23 = vector.load %arg8[%c0_14, %c0_15] : memref<32x24xf32, #tpu.memory_space<vmem>>, vector<32x24xf32>
    %cst_16 = arith.constant dense<0.000000e+00> : vector<8x24xf32>
    %24 = tpu.matmul %22, %23, %cst_16 {dimension_numbers = #tpu.dot_dimension_numbers<[1], [0], [0], [1], [0, 0, 1, 1], [], []>} : vector<8x32xf32>, vector<32x24xf32>, vector<8x24xf32> -> vector<8x24xf32>
    %c0_17 = arith.constant 0 : index
    %c0_18 = arith.constant 0 : index
    %25 = vector.load %arg9[%c0_17, %c0_18] : memref<1x24xf32, #tpu.memory_space<vmem>>, vector<1x24xf32>
    %26 = vector.broadcast %25 : vector<1x24xf32> to vector<8x24xf32>
    %27 = arith.addf %24, %26 : vector<8x24xf32>
    %28 = arith.negf %27 : vector<8x24xf32>
    %29 = math.exp %28 : vector<8x24xf32>
    %cst_19 = arith.constant 1.000000e+00 : f32
    %30 = vector.broadcast %cst_19 : f32 to vector<8x24xf32>
    %31 = arith.addf %30, %29 : vector<8x24xf32>
    %32 = arith.divf %30, %31 : vector<8x24xf32>
    %c0_20 = arith.constant 0 : index
    %c0_21 = arith.constant 0 : index
    %33 = vector.load %arg10[%c0_20, %c0_21] : memref<1x24xf32, #tpu.memory_space<vmem>>, vector<1x24xf32>
    %34 = vector.broadcast %33 : vector<1x24xf32> to vector<8x24xf32>
    %35 = arith.mulf %32, %34 : vector<8x24xf32>
    %c0_22 = arith.constant 0 : index
    %c0_23 = arith.constant 0 : index
    %36 = vector.load %arg11[%c0_22, %c0_23] : memref<8x24xf32, #tpu.memory_space<vmem>>, vector<8x24xf32>
    tpu.vector_store %arg11[%c0_22, %c0_23], %35 {strides = array<i32>} : memref<8x24xf32, #tpu.memory_space<vmem>>, vector<8x24xf32>,
    return
  }
  func.func @transform_0(%arg0: i32) -> (i32, i32) {
    %c0_i32 = arith.constant 0 : i32
    %c0_i32_0 = arith.constant 0 : i32
    return %arg0, %c0_i32 : i32, i32
  }
  func.func @transform_1(%arg0: i32) -> (i32, i32) {
    %c0_i32 = arith.constant 0 : i32
    %c0_i32_0 = arith.constant 0 : i32
    %c0_i32_1 = arith.constant 0 : i32
    return %c0_i32, %c0_i32_0 : i32, i32
  }
  func.func @transform_2(%arg0: i32) -> (i32, i32) {
    %c0_i32 = arith.constant 0 : i32
    %c0_i32_0 = arith.constant 0 : i32
    %c0_i32_1 = arith.constant 0 : i32
    return %c0_i32, %c0_i32_0 : i32, i32
  }
  func.func @transform_3(%arg0: i32) -> i32 {
    %c0_i32 = arith.constant 0 : i32
    %c0_i32_0 = arith.constant 0 : i32
    return %c0_i32 : i32
  }
  func.func @transform_4(%arg0: i32) -> (i32, i32) {
    %c0_i32 = arith.constant 0 : i32
    %c0_i32_0 = arith.constant 0 : i32
    %c0_i32_1 = arith.constant 0 : i32
    return %c0_i32, %c0_i32_0 : i32, i32
  }
  func.func @transform_5(%arg0: i32) -> (i32, i32) {
    %c0_i32 = arith.constant 0 : i32
    %c0_i32_0 = arith.constant 0 : i32
    %c0_i32_1 = arith.constant 0 : i32
    return %c0_i32, %c0_i32_0 : i32, i32
  }
  func.func @transform_6(%arg0: i32) -> i32 {
    %c0_i32 = arith.constant 0 : i32
    %c0_i32_0 = arith.constant 0 : i32
    return %c0_i32 : i32
  }
  func.func @transform_7(%arg0: i32) -> (i32, i32) {
    %c0_i32 = arith.constant 0 : i32
    %c0_i32_0 = arith.constant 0 : i32
    %c0_i32_1 = arith.constant 0 : i32
    return %c0_i32, %c0_i32_0 : i32, i32
  }
  func.func @transform_8(%arg0: i32) -> (i32, i32) {
    %c0_i32 = arith.constant 0 : i32
    %c0_i32_0 = arith.constant 0 : i32
    %c0_i32_1 = arith.constant 0 : i32
    return %c0_i32, %c0_i32_0 : i32, i32
  }
  func.func @transform_9(%arg0: i32) -> (i32, i32) {
    %c0_i32 = arith.constant 0 : i32
    %c0_i32_0 = arith.constant 0 : i32
    %c0_i32_1 = arith.constant 0 : i32
    return %c0_i32, %c0_i32_0 : i32, i32
  }
  func.func @transform_10(%arg0: i32) -> (i32, i32) {
    %c0_i32 = arith.constant 0 : i32
    %c0_i32_0 = arith.constant 0 : i32
    return %arg0, %c0_i32 : i32, i32
  }
}

</mosaic_0001>

<llo_original>
// kernel: tpu_custom_call.1
$region0: #{tpu_custom_call.1}
  #allocation0 [shape = 'u32[]', space=smem, size = 0x4, offset = 0x4, fixed_abs, tag = 'smem constant byte address 0x4 - core index']
  #allocation1 [shape = 'u32[144,128]{1,0:T(1,128)}', space=vmem, size = 0x12000, scoped, tag = 'internal scratch']
  #allocation2 [shape = 'f32[1]{0:T(128)S(6)}', space=smem, size = 0x200, scoped, tag = 'scoped memory for tpu_custom_call.1']
  #allocation3 [shape = 'f32[1]{0:T(128)S(6)}', space=smem, size = 0x200, scoped, tag = 'scoped memory for tpu_custom_call.1']
  %s0 = inlined_call_operand.vmem [shape: f32[8,4], index: 0, kind: input, shape index: {}]
  %s1 = inlined_call_operand.vmem [shape: f32[4,32], index: 1, kind: input, shape index: {}]
  %s2 = inlined_call_operand.vmem [shape: f32[1,32], index: 2, kind: input, shape index: {}]
  %s3 = inlined_call_operand.<no memory space> [shape: f32[1], index: 3, kind: input, shape index: {}]
  %s4 = inlined_call_operand.vmem [shape: f32[32,32], index: 4, kind: input, shape index: {}]
  %s5 = inlined_call_operand.vmem [shape: f32[1,32], index: 5, kind: input, shape index: {}]
  %s6 = inlined_call_operand.<no memory space> [shape: f32[1], index: 6, kind: input, shape index: {}]
  %s7 = inlined_call_operand.vmem [shape: f32[32,24], index: 7, kind: input, shape index: {}]
  %s8 = inlined_call_operand.vmem [shape: f32[1,24], index: 8, kind: input, shape index: {}]
  %s9 = inlined_call_operand.vmem [shape: f32[1,24], index: 9, kind: input, shape index: {}]
  %s10 = inlined_call_operand.hbm [shape: f32[8,24], index: 10, kind: output, shape index: {}]
  %s11 = sld [smem:[#allocation0]]
  $region50: #{tpu_custom_call.1} parent=0
    _
  %s13 = ssub.s32 1, %s11
  %s14 = scalar_select 0, %s13, %s11
  %15 = sst [smem:[#allocation2]] %s3
  %16 = sst [smem:[#allocation3]] %s6
  $region1: #{tpu_custom_call.1} parent=0
    #allocation4 [shape = 'u8[4096]{0}', space=vmem, size = 0x1000, scoped, tag = 'output window, operand 0, single buffered']
    #allocation5 [shape = 's32[1]{0}', space=sflag, size = 0x4, scoped, tag = 'scoped memory for tpu_custom_call.1']
    %17 = vsyncpa [#allocation5], 0
    // Predicated region
    $region2: #{tpu_custom_call.1} parent=1 // pred_check
      _
    $region3: #{tpu_custom_call.1} parent=1 // pred_check_branch
      %19 = sbr.rel (0) target = $region5
    $region4: #{tpu_custom_call.1} parent=1 // pred_region
      _
    $region5: #{tpu_custom_call.1} parent=1 // pred_fallthru
      _
    // Predicated region
    $region6: #{tpu_custom_call.1} parent=1 // pred_check
      _
    $region7: #{tpu_custom_call.1} parent=1 // pred_check_branch
      %21 = sbr.rel (0) target = $region9
    $region8: #{tpu_custom_call.1} parent=1 // pred_region
      _
    $region9: #{tpu_custom_call.1} parent=1 // pred_fallthru
      _
    // Predicated region
    $region10: #{tpu_custom_call.1} parent=1 // pred_check
      _
    $region11: #{tpu_custom_call.1} parent=1 // pred_check_branch
      %23 = sbr.rel (0) target = $region13
    $region12: #{tpu_custom_call.1} parent=1 // pred_region
      _
    $region13: #{tpu_custom_call.1} parent=1 // pred_fallthru
      _
    // Predicated region
    $region14: #{tpu_custom_call.1} parent=1 // pred_check
      _
    $region15: #{tpu_custom_call.1} parent=1 // pred_check_branch
      %25 = sbr.rel (0) target = $region17
    $region16: #{tpu_custom_call.1} parent=1 // pred_region
      _
    $region17: #{tpu_custom_call.1} parent=1 // pred_fallthru
      _
    // Predicated region
    $region18: #{tpu_custom_call.1} parent=1 // pred_check
      _
    $region19: #{tpu_custom_call.1} parent=1 // pred_check_branch
      %27 = sbr.rel (0) target = $region21
    $region20: #{tpu_custom_call.1} parent=1 // pred_region
      _
    $region21: #{tpu_custom_call.1} parent=1 // pred_fallthru
      _
    // Predicated region
    $region22: #{tpu_custom_call.1} parent=1 // pred_check
      _
    $region23: #{tpu_custom_call.1} parent=1 // pred_check_branch
      %29 = sbr.rel (0) target = $region25
    $region24: #{tpu_custom_call.1} parent=1 // pred_region
      _
    $region25: #{tpu_custom_call.1} parent=1 // pred_fallthru
      _
    // Predicated region
    $region26: #{tpu_custom_call.1} parent=1 // pred_check
      _
    $region27: #{tpu_custom_call.1} parent=1 // pred_check_branch
      %31 = sbr.rel (0) target = $region29
    $region28: #{tpu_custom_call.1} parent=1 // pred_region
      _
    $region29: #{tpu_custom_call.1} parent=1 // pred_fallthru
      _
    // Predicated region
    $region30: #{tpu_custom_call.1} parent=1 // pred_check
      _
    $region31: #{tpu_custom_call.1} parent=1 // pred_check_branch
      %33 = sbr.rel (0) target = $region33
    $region32: #{tpu_custom_call.1} parent=1 // pred_region
      _
    $region33: #{tpu_custom_call.1} parent=1 // pred_fallthru
      _
    // Predicated region
    $region34: #{tpu_custom_call.1} parent=1 // pred_check
      _
    $region35: #{tpu_custom_call.1} parent=1 // pred_check_branch
      %35 = sbr.rel (0) target = $region37
    $region36: #{tpu_custom_call.1} parent=1 // pred_region
      _
    $region37: #{tpu_custom_call.1} parent=1 // pred_fallthru
      _
    // Predicated region
    $region38: #{tpu_custom_call.1} parent=1 // pred_check
      _
    $region39: #{tpu_custom_call.1} parent=1 // pred_check_branch
      %37 = sbr.rel (0) target = $region41
    $region40: #{tpu_custom_call.1} parent=1 // pred_region
      _
    $region41: #{tpu_custom_call.1} parent=1 // pred_fallthru
      _
    %v38 = vld [vmem:[%s0] sm:$0xff]
    %v39 = vld [vmem:[%s1] sm:$0xf]
    %v40 = vld [vmem:[%s2] sm:$0x1]
    %v42 = vlaneseq
    %v43 = vshrl.u32 %v42, 7
    %v44 = vsub.s32 0, %v43
    %v45 = vrot.slane %v40, %v44
    %vm47 = vcmask 31744
    %v49 = vsel %vm47, %v38, 0
    %vm51 = vcmask 1043456
    %v53 = vsel %vm51, %v39, 0
    %55 = vmatprep.subr.mxu0 0.0
    %56 = vmatpush1.msra.mxu0 0.0
    %57 = vmatprep.subr.mxu0 0.0
    %58 = vmatpush1.msra.mxu0 0.0
    %59 = vmatprep.subr.mxu0 0.0
    %60 = vmatpush1.msra.mxu0 0.0
    %61 = vmatprep.subr.mxu0 0.0
    %62 = vmatpush1.msra.mxu0 0.0
    %63 = vmatprep.subr.mxu0 0.0
    %64 = vmatpush1.msra.mxu0 0.0
    %65 = vmatprep.subr.mxu0 0.0
    %66 = vmatpush1.msra.mxu0 0.0
    %67 = vmatprep.subr.mxu0 0.0
    %68 = vmatpush1.msra.mxu0 0.0
    %69 = vmatprep.subr.mxu0 0.0
    %70 = vmatpush1.msra.mxu0 0.0
    %71 = vmatprep.subr.mxu0 0.0
    %72 = vmatpush1.msra.mxu0 0.0
    %73 = vmatprep.subr.mxu0 0.0
    %74 = vmatpush1.msra.mxu0 0.0
    %75 = vmatprep.subr.mxu0 0.0
    %76 = vmatpush1.msra.mxu0 0.0
    %77 = vmatprep.subr.mxu0 0.0
    %78 = vmatpush1.msra.mxu0 0.0
    %79 = vmatprep.subr.mxu0 0.0
    %80 = vmatpush1.msra.mxu0 0.0
    %81 = vmatprep.subr.mxu0 0.0
    %82 = vmatpush1.msra.mxu0 0.0
    %83 = vmatprep.subr.mxu0 0.0
    %84 = vmatpush1.msra.mxu0 0.0
    %85 = vmatprep.subr.mxu0 0.0
    %86 = vmatpush1.msra.mxu0 %v53
    %87 = vmatprep.subr.mxu0 0.0
    %88 = vmatpush2.msra.mxu0 0.0
    %89 = vmatprep.subr.mxu0 0.0
    %90 = vmatpush2.msra.mxu0 0.0
    %91 = vmatprep.subr.mxu0 0.0
    %92 = vmatpush2.msra.mxu0 0.0
    %93 = vmatprep.subr.mxu0 0.0
    %94 = vmatpush2.msra.mxu0 0.0
    %95 = vmatprep.subr.mxu0 0.0
    %96 = vmatpush2.msra.mxu0 0.0
    %97 = vmatprep.subr.mxu0 0.0
    %98 = vmatpush2.msra.mxu0 0.0
    %99 = vmatprep.subr.mxu0 0.0
    %100 = vmatpush2.msra.mxu0 0.0
    %101 = vmatprep.subr.mxu0 0.0
    %102 = vmatpush2.msra.mxu0 0.0
    %103 = vmatprep.subr.mxu0 0.0
    %104 = vmatpush2.msra.mxu0 0.0
    %105 = vmatprep.subr.mxu0 0.0
    %106 = vmatpush2.msra.mxu0 0.0
    %107 = vmatprep.subr.mxu0 0.0
    %108 = vmatpush2.msra.mxu0 0.0
    %109 = vmatprep.subr.mxu0 0.0
    %110 = vmatpush2.msra.mxu0 0.0
    %111 = vmatprep.subr.mxu0 0.0
    %112 = vmatpush2.msra.mxu0 0.0
    %113 = vmatprep.subr.mxu0 0.0
    %114 = vmatpush2.msra.mxu0 0.0
    %115 = vmatprep.subr.mxu0 0.0
    %116 = vmatpush2.msra.mxu0 0.0
    %117 = vmatprep.subr.mxu0 0.0
    %118 = vmatpush2.msra.mxu0 0.0
    %119 = vmatprep.mubr.f32.mxu0 0.0
    %120 = vmatmul.mubr.f32.gmra.mxu0 %v49
    %v121 = vpop.f32.mrf.mxu0
    %v122 = vadd.f32 %v45, %v121
    %v123 = vpop.f32.mrf.mxu0
    %124 = vdwg.mxu0
    %s125 = sld [smem:[#allocation2]]
    %vm126 = vcmp.ge.f32.partialorder %v122, 0.0
    %v127 = vstv %s125
    %v128 = vmul.f32 %v127, %v122
    %v129 = vsel %vm126, %v122, %v128
    %v130 = vld [vmem:[%s4] sm:$0xff]
    %v131 = vld [vmem:[%s4 + $0x8] sm:$0xff]
    %v132 = vld [vmem:[%s4 + $0x10] sm:$0xff]
    %v133 = vld [vmem:[%s4 + $0x18] sm:$0xff]
    %v134 = vld [vmem:[%s5] sm:$0x1]
    %v136 = vlaneseq
    %v137 = vshrl.u32 %v136, 7
    %v138 = vsub.s32 0, %v137
    %v139 = vrot.slane %v134, %v138
    %vm141 = vcmask 261120
    %v143 = vsel %vm141, %v129, 0
    %145 = vmatprep.subr.mxu0 0.0
    %146 = vmatpush1.msra.mxu0 0.0
    %147 = vmatprep.subr.mxu0 0.0
    %148 = vmatpush1.msra.mxu0 0.0
    %149 = vmatprep.subr.mxu0 0.0
    %150 = vmatpush1.msra.mxu0 0.0
    %151 = vmatprep.subr.mxu0 0.0
    %152 = vmatpush1.msra.mxu0 0.0
    %153 = vmatprep.subr.mxu0 0.0
    %154 = vmatpush1.msra.mxu0 0.0
    %155 = vmatprep.subr.mxu0 0.0
    %156 = vmatpush1.msra.mxu0 0.0
    %157 = vmatprep.subr.mxu0 0.0
    %158 = vmatpush1.msra.mxu0 0.0
    %159 = vmatprep.subr.mxu0 0.0
    %160 = vmatpush1.msra.mxu0 0.0
    %161 = vmatprep.subr.mxu0 0.0
    %162 = vmatpush1.msra.mxu0 0.0
    %163 = vmatprep.subr.mxu0 0.0
    %164 = vmatpush1.msra.mxu0 0.0
    %165 = vmatprep.subr.mxu0 0.0
    %166 = vmatpush1.msra.mxu0 0.0
    %167 = vmatprep.subr.mxu0 0.0
    %168 = vmatpush1.msra.mxu0 0.0
    %169 = vmatprep.subr.mxu0 0.0
    %170 = vmatpush1.msra.mxu0 %v133
    %171 = vmatprep.subr.mxu0 0.0
    %172 = vmatpush1.msra.mxu0 %v132
    %173 = vmatprep.subr.mxu0 0.0
    %174 = vmatpush1.msra.mxu0 %v131
    %175 = vmatprep.subr.mxu0 0.0
    %176 = vmatpush1.msra.mxu0 %v130
    %177 = vmatprep.subr.mxu0 0.0
    %178 = vmatpush2.msra.mxu0 0.0
    %179 = vmatprep.subr.mxu0 0.0
    %180 = vmatpush2.msra.mxu0 0.0
    %181 = vmatprep.subr.mxu0 0.0
    %182 = vmatpush2.msra.mxu0 0.0
    %183 = vmatprep.subr.mxu0 0.0
    %184 = vmatpush2.msra.mxu0 0.0
    %185 = vmatprep.subr.mxu0 0.0
    %186 = vmatpush2.msra.mxu0 0.0
    %187 = vmatprep.subr.mxu0 0.0
    %188 = vmatpush2.msra.mxu0 0.0
    %189 = vmatprep.subr.mxu0 0.0
    %190 = vmatpush2.msra.mxu0 0.0
    %191 = vmatprep.subr.mxu0 0.0
    %192 = vmatpush2.msra.mxu0 0.0
    %193 = vmatprep.subr.mxu0 0.0
    %194 = vmatpush2.msra.mxu0 0.0
    %195 = vmatprep.subr.mxu0 0.0
    %196 = vmatpush2.msra.mxu0 0.0
    %197 = vmatprep.subr.mxu0 0.0
    %198 = vmatpush2.msra.mxu0 0.0
    %199 = vmatprep.subr.mxu0 0.0
    %200 = vmatpush2.msra.mxu0 0.0
    %201 = vmatprep.subr.mxu0 0.0
    %202 = vmatpush2.msra.mxu0 0.0
    %203 = vmatprep.subr.mxu0 0.0
    %204 = vmatpush2.msra.mxu0 0.0
    %205 = vmatprep.subr.mxu0 0.0
    %206 = vmatpush2.msra.mxu0 0.0
    %207 = vmatprep.subr.mxu0 0.0
    %208 = vmatpush2.msra.mxu0 0.0
    %209 = vmatprep.mubr.f32.mxu0 0.0
    %210 = vmatmul.mubr.f32.gmra.mxu0 %v143
    %v211 = vpop.f32.mrf.mxu0
    %v212 = vadd.f32 %v139, %v211
    %v213 = vpop.f32.mrf.mxu0
    %214 = vdwg.mxu0
    %s215 = sld [smem:[#allocation3]]
    %vm216 = vcmp.ge.f32.partialorder %v212, 0.0
    %v217 = vstv %s215
    %v218 = vmul.f32 %v217, %v212
    %v219 = vsel %vm216, %v212, %v218
    %v220 = vld [vmem:[%s7] sm:$0xff]
    %v221 = vld [vmem:[%s7 + $0x8] sm:$0xff]
    %v222 = vld [vmem:[%s7 + $0x10] sm:$0xff]
    %v223 = vld [vmem:[%s7 + $0x18] sm:$0xff]
    %v224 = vld [vmem:[%s8] sm:$0x1]
    %v226 = vlaneseq
    %v227 = vshrl.u32 %v226, 7
    %v228 = vsub.s32 0, %v227
    %v229 = vrot.slane %v224, %v228
    %v232 = vsel %vm141, %v219, 0
    %234 = vmatprep.subr.mxu0 0.0
    %235 = vmatpush1.msra.mxu0 0.0
    %236 = vmatprep.subr.mxu0 0.0
    %237 = vmatpush1.msra.mxu0 0.0
    %238 = vmatprep.subr.mxu0 0.0
    %239 = vmatpush1.msra.mxu0 0.0
    %240 = vmatprep.subr.mxu0 0.0
    %241 = vmatpush1.msra.mxu0 0.0
    %242 = vmatprep.subr.mxu0 0.0
    %243 = vmatpush1.msra.mxu0 0.0
    %244 = vmatprep.subr.mxu0 0.0
    %245 = vmatpush1.msra.mxu0 0.0
    %246 = vmatprep.subr.mxu0 0.0
    %247 = vmatpush1.msra.mxu0 0.0
    %248 = vmatprep.subr.mxu0 0.0
    %249 = vmatpush1.msra.mxu0 0.0
    %250 = vmatprep.subr.mxu0 0.0
    %251 = vmatpush1.msra.mxu0 0.0
    %252 = vmatprep.subr.mxu0 0.0
    %253 = vmatpush1.msra.mxu0 0.0
    %254 = vmatprep.subr.mxu0 0.0
    %255 = vmatpush1.msra.mxu0 0.0
    %256 = vmatprep.subr.mxu0 0.0
    %257 = vmatpush1.msra.mxu0 0.0
    %258 = vmatprep.subr.mxu0 0.0
    %259 = vmatpush1.msra.mxu0 %v223
    %260 = vmatprep.subr.mxu0 0.0
    %261 = vmatpush1.msra.mxu0 %v222
    %262 = vmatprep.subr.mxu0 0.0
    %263 = vmatpush1.msra.mxu0 %v221
    %264 = vmatprep.subr.mxu0 0.0
    %265 = vmatpush1.msra.mxu0 %v220
    %266 = vmatprep.subr.mxu0 0.0
    %267 = vmatpush2.msra.mxu0 0.0
    %268 = vmatprep.subr.mxu0 0.0
    %269 = vmatpush2.msra.mxu0 0.0
    %270 = vmatprep.subr.mxu0 0.0
    %271 = vmatpush2.msra.mxu0 0.0
    %272 = vmatprep.subr.mxu0 0.0
    %273 = vmatpush2.msra.mxu0 0.0
    %274 = vmatprep.subr.mxu0 0.0
    %275 = vmatpush2.msra.mxu0 0.0
    %276 = vmatprep.subr.mxu0 0.0
    %277 = vmatpush2.msra.mxu0 0.0
    %278 = vmatprep.subr.mxu0 0.0
    %279 = vmatpush2.msra.mxu0 0.0
    %280 = vmatprep.subr.mxu0 0.0
    %281 = vmatpush2.msra.mxu0 0.0
    %282 = vmatprep.subr.mxu0 0.0
    %283 = vmatpush2.msra.mxu0 0.0
    %284 = vmatprep.subr.mxu0 0.0
    %285 = vmatpush2.msra.mxu0 0.0
    %286 = vmatprep.subr.mxu0 0.0
    %287 = vmatpush2.msra.mxu0 0.0
    %288 = vmatprep.subr.mxu0 0.0
    %289 = vmatpush2.msra.mxu0 0.0
    %290 = vmatprep.subr.mxu0 0.0
    %291 = vmatpush2.msra.mxu0 0.0
    %292 = vmatprep.subr.mxu0 0.0
    %293 = vmatpush2.msra.mxu0 0.0
    %294 = vmatprep.subr.mxu0 0.0
    %295 = vmatpush2.msra.mxu0 0.0
    %296 = vmatprep.subr.mxu0 0.0
    %297 = vmatpush2.msra.mxu0 0.0
    %298 = vmatprep.mubr.f32.mxu0 0.0
    %299 = vmatmul.mubr.f32.gmra.mxu0 %v232
    %v300 = vpop.f32.mrf.mxu0
    %v301 = vadd.f32 %v229, %v300
    %v302 = vpop.f32.mrf.mxu0
    %303 = vdwg.mxu0
    %v304 = vxor.u32 %v301, 2147483648
    %v305 = vmul.f32 %v304, 1.442695
    %v306 = vpow.pop %v305
    %v307 = vadd.f32 %v306, 1.0
    %v308 = vrcp.pop %v307
    %v309 = vmul.f32 1.0, %v308
    %v310 = vld [vmem:[%s9] sm:$0x1]
    %v312 = vlaneseq
    %v313 = vshrl.u32 %v312, 7
    %v314 = vsub.s32 0, %v313
    %v315 = vrot.slane %v310, %v314
    %v317 = vmul.f32 %v309, %v315
    %vm318 = vcmask 195584
    %319 = vst.msk [vmem:[#allocation4] sm:$0xff] %vm318, %v317
    // Predicated region
    $region42: #{tpu_custom_call.1} parent=1 // pred_check
      _
    $region43: #{tpu_custom_call.1} parent=1 // pred_check_branch
      %321 = sbr.rel (0) target = $region45
    $region44: #{tpu_custom_call.1} parent=1 // pred_region
      %s323 = ssub.s32 128, 128
      %324 = vsyncadd [#allocation5], %s323
      %s326 = sshll.u32 [#allocation4], 4
      %s327 = int_to_ptr.vmem [resolvable:$true] %s326
      %329 = dma.vmem_to_hbm [thread:$0]  %s327, 128, %s10, [#allocation5]
    $region45: #{tpu_custom_call.1} parent=1 // pred_fallthru
      _
    // Predicated region
    $region46: #{tpu_custom_call.1} parent=1 // pred_check
      _
    $region47: #{tpu_custom_call.1} parent=1 // pred_check_branch
      %331 = sbr.rel (0) target = $region49
    $region48: #{tpu_custom_call.1} parent=1 // pred_region
      %332 = dma.done [#allocation5], 128
    $region49: #{tpu_custom_call.1} parent=1 // pred_fallthru
      _
    %333 = vsyncpa [#allocation5], 1

</llo_original>
